<compile_context>
chip_gen: v5e
topology: v5e:2x2
jax: 0.10.0
libtpu: 0.0.40
codegen_flags: <defaults>
</compile_context>

<pallas_src>
import jax
import jax.numpy as jnp
from jax.experimental import pallas as pl
from jax.experimental.pallas import tpu as pltpu

NEG_SLOPE = 0.01  # PyTorch nn.LeakyReLU default


def _leaky_relu(v):
    # slope < 1  =>  max(v, slope*v) == leaky_relu(v); cheaper than where().
    return jnp.maximum(v, NEG_SLOPE * v)


def _round_up(a, b):
    return ((a + b - 1) // b) * b


def fullres_kernel(x_ref, w1_ref, b1_ref, w2_ref, b2_ref, o_ref):
    # x_ref: (TN, Dp) streaming dtype; w*_ref: (Dp, Dp) MXU dtype; b*_ref: (1, Dp) f32.
    x = x_ref[...]
    x_res = x.astype(jnp.float32)        # f32 copy for the residual epilogue
    x_mm = x.astype(w1_ref.dtype)        # MXU operand (no-op if already bf16)

    # Linear 1 (MXU, f32 accumulate) + bias + LeakyReLU (f32 on the VPU).
    h = jnp.dot(x_mm, w1_ref[...], preferred_element_type=jnp.float32)
    h = _leaky_relu(h + b1_ref[...])

    # TODO(synk): training-mode dropout (pltpu.prng_random_bits masking) is not
    # implemented; nn.Dropout is identity in eval mode.

    # Linear 2 (MXU) + bias + residual + LeakyReLU, all accumulated in f32.
    y = jnp.dot(h.astype(w2_ref.dtype), w2_ref[...],
                preferred_element_type=jnp.float32)
    y = _leaky_relu(y + b2_ref[...] + x_res)
    o_ref[...] = y.astype(o_ref.dtype)


def _build_call(tn, Dp, np_pad, io_dtype, vmem_limit, cost, single_buffer_weights):
    # Single-buffer the grid-invariant operands when the installed JAX supports
    # pipeline_mode=pl.Buffered(1); caller falls back to default buffering.
    res_kw = {"pipeline_mode": pl.Buffered(1)} if single_buffer_weights else {}
    return pl.pallas_call(
        fullres_kernel,
        out_shape=jax.ShapeDtypeStruct((np_pad, Dp), io_dtype),
        grid_spec=pltpu.PrefetchScalarGridSpec(
            num_scalar_prefetch=0,
            grid=(np_pad // tn,),
            in_specs=[
                pl.BlockSpec((tn, Dp), lambda i: (i, 0)),             # x: streamed
                pl.BlockSpec((Dp, Dp), lambda i: (0, 0), **res_kw),   # w1: resident
                pl.BlockSpec((1, Dp), lambda i: (0, 0), **res_kw),    # b1: resident
                pl.BlockSpec((Dp, Dp), lambda i: (0, 0), **res_kw),   # w2: resident
                pl.BlockSpec((1, Dp), lambda i: (0, 0), **res_kw),    # b2: resident
            ],
            out_specs=pl.BlockSpec((tn, Dp), lambda i: (i, 0)),
        ),
        compiler_params=pltpu.CompilerParams(
            dimension_semantics=("parallel",),   # lets v7x shard tiles over 2 TCs
            vmem_limit_bytes=vmem_limit,
        ),
        cost_estimate=cost,
    )


def full_res_layer(x, w1, b1, w2, b2, *, tn=None, compute_dtype=jnp.bfloat16):
    """x: (B, S, D). w1/w2: (D, D) pre-transposed (= torch W.T). b1/b2: (D,).

    MXU operands and streamed activations use `compute_dtype` (bf16 default);
    accumulation, bias, residual and LeakyReLU stay f32. Output dtype == x.dtype.
    """
    B, S, D = x.shape
    N = B * S
    io_dtype = jnp.dtype(compute_dtype)
    w_dtype = jnp.dtype(compute_dtype)

    # --- lane-dense feature layout -------------------------------------------
    if D < 128:
        Dpad = int(pl.next_power_of_2(D))      # divides 128
        P = 128 // Dpad                        # tokens packed per 128-lane row
    else:
        Dpad = _round_up(D, 128)
        P = 1
    Dp = P * Dpad

    # Zero-pad features; padded lanes stay exactly zero through both layers.
    if Dpad != D:
        w1 = jnp.pad(w1, ((0, Dpad - D), (0, Dpad - D)))
        w2 = jnp.pad(w2, ((0, Dpad - D), (0, Dpad - D)))
        b1 = jnp.pad(b1, (0, Dpad - D))
        b2 = jnp.pad(b2, (0, Dpad - D))
    w1 = w1.astype(w_dtype)
    w2 = w2.astype(w_dtype)
    b1 = b1.astype(jnp.float32)
    b2 = b2.astype(jnp.float32)

    if P > 1:
        # Block-diagonal weights: P independent tokens per packed row.
        eye = jnp.eye(P, dtype=w_dtype)
        w1p = jnp.einsum("pq,de->pdqe", eye, w1).reshape(Dp, Dp)
        w2p = jnp.einsum("pq,de->pdqe", eye, w2).reshape(Dp, Dp)
        b1p = jnp.tile(b1, P).reshape(1, Dp)
        b2p = jnp.tile(b2, P).reshape(1, Dp)
    else:
        w1p, w2p = w1, w2
        b1p, b2p = b1.reshape(1, Dp), b2.reshape(1, Dp)

    # --- generation-aware tile sizing ----------------------------------------
    np_rows = pl.cdiv(N, P)
    io_bytes = io_dtype.itemsize
    w_bytes = jnp.dtype(w_dtype).itemsize

    try:
        vmem_cap = int(pltpu.get_tpu_info().vmem_capacity_bytes)
    except Exception:
        vmem_cap = 64 << 20                    # v7x per-TC VMEM: safe lower bound
    budget = int(0.6 * vmem_cap)

    # Resident operands (budget 2x in case single-buffering is unavailable).
    weight_bytes = 2 * (2 * Dp * Dp * w_bytes + 2 * Dp * 4)
    # Per packed row: double-buffered x & out tiles + in-kernel f32 temporaries.
    per_row = 2 * 2 * Dp * io_bytes + 4 * Dp * 4

    if tn is None:
        tn_cap = max(8, ((budget - weight_bytes) // per_row) // 8 * 8)
        tn_pref = 1024 if Dp >= 512 else 2048
        tn_max = max(8, min(tn_pref, tn_cap))
        # >=2 tiles (v7x megacore) and shrink tn to bound zero-padding waste.
        n_tiles = max(2, pl.cdiv(np_rows, tn_max))
        tn = max(8, min(tn_max, _round_up(pl.cdiv(np_rows, n_tiles), 8)))
    np_pad = _round_up(np_rows, tn)
    n_pad = np_pad * P

    # --- pack x: (N, D) -> (np_pad, Dp) in the streaming dtype ----------------
    x2 = x.reshape(N, D)
    if Dpad != D:
        x2 = jnp.pad(x2, ((0, 0), (0, Dpad - D)))
    x2 = x2.astype(io_dtype)
    if n_pad != N:
        x2 = jnp.pad(x2, ((0, n_pad - N), (0, 0)))
    xp = x2.reshape(np_pad, Dp)

    need = weight_bytes + tn * per_row
    vmem_limit = int(min(max(int(1.25 * need), 16 << 20), int(0.7 * vmem_cap)))

    cost = pl.CostEstimate(
        flops=2 * 2 * np_pad * P * Dpad * Dpad,           # useful (un-inflated) flops
        transcendentals=0,
        bytes_accessed=int(2 * np_pad * Dp * io_bytes
                           + 2 * Dp * Dp * w_bytes + 2 * Dp * 4),
    )

    args = (xp, w1p, b1p, w2p, b2p)
    try:
        outp = _build_call(tn, Dp, np_pad, io_dtype, vmem_limit, cost, True)(*args)
    except Exception:
        # pl.Buffered(1) on resident operands not supported by this JAX/Mosaic
        # build -> fall back to default-buffered weights (still correct).
        outp = _build_call(tn, Dp, np_pad, io_dtype, vmem_limit, cost, False)(*args)

    out2 = outp.reshape(n_pad, Dpad)[:N, :D].astype(x.dtype)
    return out2.reshape(B, S, D)


def reference(x, w1, b1, w2, b2):
    h = _leaky_relu(jnp.einsum("bsd,de->bse", x, w1) + b1)
    y = jnp.einsum("bsd,de->bse", h, w2) + b2 + x
    return _leaky_relu(y)


if __name__ == "__main__":
    B, S, D = 2, 8, 32  # batch=2, seq=8, hidden(in_dim)=32

    key = jax.random.PRNGKey(0)
    kx, kw1, kb1, kw2, kb2 = jax.random.split(key, 5)

    # Deterministic init mimicking nn.Linear: U(-1/sqrt(D), 1/sqrt(D)).
    bound = 1.0 / jnp.sqrt(jnp.float32(D))
    x = jax.random.normal(kx, (B, S, D), dtype=jnp.float32)
    # Stored as (D_in, D_out) = torch_weight.T
    w1 = jax.random.uniform(kw1, (D, D), jnp.float32, -bound, bound)
    b1 = jax.random.uniform(kb1, (D,), jnp.float32, -bound, bound)
    w2 = jax.random.uniform(kw2, (D, D), jnp.float32, -bound, bound)
    b2 = jax.random.uniform(kb2, (D,), jnp.float32, -bound, bound)

    ref = reference(x, w1, b1, w2, b2)

    # Tight structural check on the f32 path (bit-comparable to the reference).
    out_f32 = jax.block_until_ready(
        full_res_layer(x, w1, b1, w2, b2, compute_dtype=jnp.float32))
    assert out_f32.shape == (B, S, D), out_f32.shape
    assert jnp.allclose(out_f32, ref, atol=1e-5, rtol=1e-5), (
        float(jnp.max(jnp.abs(out_f32 - ref))))

    # Default fast path: bf16 MXU operands + bf16 activation streaming,
    # f32 accumulation/epilogue -> small bounded drift vs the f32 reference.
    out = jax.block_until_ready(full_res_layer(x, w1, b1, w2, b2))
    assert out.shape == (B, S, D), out.shape
    assert jnp.allclose(out, ref, atol=5e-2, rtol=5e-2), (
        float(jnp.max(jnp.abs(out - ref))))

    print("KERNEL_OK")
</pallas_src>

<mosaic_0001>
module attributes {stable_mosaic.version = 11 : i64} {
  func.func @fullres_kernel(%arg0: i32, %arg1: memref<8x128xf32, #tpu.memory_space<vmem>>, %arg2: memref<128x128xf32, #tpu.memory_space<vmem>>, %arg3: memref<1x128xf32, #tpu.memory_space<vmem>>, %arg4: memref<128x128xf32, #tpu.memory_space<vmem>>, %arg5: memref<1x128xf32, #tpu.memory_space<vmem>>, %arg6: memref<8x128xf32, #tpu.memory_space<vmem>>) attributes {dimension_semantics = [#tpu.dimension_semantics<parallel>], iteration_bounds = array<i64: 1>, scalar_prefetch = 0 : i64, scratch_operands = 0 : i64, tpu.core_type = #tpu.core_type<tc>, window_params = [{transform_indices = @transform_0, window_bounds = array<i64: 8, 128>}, {pipeline_mode = #tpu.pipeline_mode<synchronous>, transform_indices = @transform_1, window_bounds = array<i64: 128, 128>}, {pipeline_mode = #tpu.pipeline_mode<synchronous>, transform_indices = @transform_2, window_bounds = array<i64: 1, 128>}, {pipeline_mode = #tpu.pipeline_mode<synchronous>, transform_indices = @transform_3, window_bounds = array<i64: 128, 128>}, {pipeline_mode = #tpu.pipeline_mode<synchronous>, transform_indices = @transform_4, window_bounds = array<i64: 1, 128>}, {transform_indices = @transform_5, window_bounds = array<i64: 8, 128>}]} {
    %c0 = arith.constant 0 : index
    %c0_0 = arith.constant 0 : index
    %0 = vector.load %arg1[%c0, %c0_0] : memref<8x128xf32, #tpu.memory_space<vmem>>, vector<8x128xf32>
    %c0_1 = arith.constant 0 : index
    %c0_2 = arith.constant 0 : index
    %1 = vector.load %arg2[%c0_1, %c0_2] : memref<128x128xf32, #tpu.memory_space<vmem>>, vector<128x128xf32>
    %cst = arith.constant dense<0.000000e+00> : vector<8x128xf32>
    %2 = tpu.matmul %0, %1, %cst {dimension_numbers = #tpu.dot_dimension_numbers<[1], [0], [0], [1], [0, 0, 1, 1], [], []>} : vector<8x128xf32>, vector<128x128xf32>, vector<8x128xf32> -> vector<8x128xf32>
    %c0_3 = arith.constant 0 : index
    %c0_4 = arith.constant 0 : index
    %3 = vector.load %arg3[%c0_3, %c0_4] : memref<1x128xf32, #tpu.memory_space<vmem>>, vector<1x128xf32>
    %4 = vector.broadcast %3 : vector<1x128xf32> to vector<8x128xf32>
    %5 = arith.addf %2, %4 : vector<8x128xf32>
    %cst_5 = arith.constant 0.00999999977 : f32
    %6 = vector.broadcast %cst_5 : f32 to vector<8x128xf32>
    %7 = arith.mulf %6, %5 : vector<8x128xf32>
    %8 = arith.maximumf %5, %7 : vector<8x128xf32>
    %c0_6 = arith.constant 0 : index
    %c0_7 = arith.constant 0 : index
    %9 = vector.load %arg4[%c0_6, %c0_7] : memref<128x128xf32, #tpu.memory_space<vmem>>, vector<128x128xf32>
    %cst_8 = arith.constant dense<0.000000e+00> : vector<8x128xf32>
    %10 = tpu.matmul %8, %9, %cst_8 {dimension_numbers = #tpu.dot_dimension_numbers<[1], [0], [0], [1], [0, 0, 1, 1], [], []>} : vector<8x128xf32>, vector<128x128xf32>, vector<8x128xf32> -> vector<8x128xf32>
    %c0_9 = arith.constant 0 : index
    %c0_10 = arith.constant 0 : index
    %11 = vector.load %arg5[%c0_9, %c0_10] : memref<1x128xf32, #tpu.memory_space<vmem>>, vector<1x128xf32>
    %12 = vector.broadcast %11 : vector<1x128xf32> to vector<8x128xf32>
    %13 = arith.addf %10, %12 : vector<8x128xf32>
    %14 = arith.addf %13, %0 : vector<8x128xf32>
    %cst_11 = arith.constant 0.00999999977 : f32
    %15 = vector.broadcast %cst_11 : f32 to vector<8x128xf32>
    %16 = arith.mulf %15, %14 : vector<8x128xf32>
    %17 = arith.maximumf %14, %16 : vector<8x128xf32>
    %c0_12 = arith.constant 0 : index
    %c0_13 = arith.constant 0 : index
    %18 = vector.load %arg6[%c0_12, %c0_13] : memref<8x128xf32, #tpu.memory_space<vmem>>, vector<8x128xf32>
    tpu.vector_store %arg6[%c0_12, %c0_13], %17 {strides = array<i32>} : memref<8x128xf32, #tpu.memory_space<vmem>>, vector<8x128xf32>,
    return
  }
  func.func @transform_0(%arg0: i32) -> (i32, i32) {
    %c0_i32 = arith.constant 0 : i32
    %c0_i32_0 = arith.constant 0 : i32
    return %arg0, %c0_i32 : i32, i32
  }
  func.func @transform_1(%arg0: i32) -> (i32, i32) {
    %c0_i32 = arith.constant 0 : i32
    %c0_i32_0 = arith.constant 0 : i32
    %c0_i32_1 = arith.constant 0 : i32
    return %c0_i32, %c0_i32_0 : i32, i32
  }
  func.func @transform_2(%arg0: i32) -> (i32, i32) {
    %c0_i32 = arith.constant 0 : i32
    %c0_i32_0 = arith.constant 0 : i32
    %c0_i32_1 = arith.constant 0 : i32
    return %c0_i32, %c0_i32_0 : i32, i32
  }
  func.func @transform_3(%arg0: i32) -> (i32, i32) {
    %c0_i32 = arith.constant 0 : i32
    %c0_i32_0 = arith.constant 0 : i32
    %c0_i32_1 = arith.constant 0 : i32
    return %c0_i32, %c0_i32_0 : i32, i32
  }
  func.func @transform_4(%arg0: i32) -> (i32, i32) {
    %c0_i32 = arith.constant 0 : i32
    %c0_i32_0 = arith.constant 0 : i32
    %c0_i32_1 = arith.constant 0 : i32
    return %c0_i32, %c0_i32_0 : i32, i32
  }
  func.func @transform_5(%arg0: i32) -> (i32, i32) {
    %c0_i32 = arith.constant 0 : i32
    %c0_i32_0 = arith.constant 0 : i32
    return %arg0, %c0_i32 : i32, i32
  }
}

module attributes {stable_mosaic.version = 11 : i64} {
  func.func @fullres_kernel(%arg0: i32, %arg1: memref<8x128xf32, #tpu.memory_space<vmem>>, %arg2: memref<128x128xf32, #tpu.memory_space<vmem>>, %arg3: memref<1x128xf32, #tpu.memory_space<vmem>>, %arg4: memref<128x128xf32, #tpu.memory_space<vmem>>, %arg5: memref<1x128xf32, #tpu.memory_space<vmem>>, %arg6: memref<8x128xf32, #tpu.memory_space<vmem>>) attributes {dimension_semantics = [#tpu.dimension_semantics<parallel>], iteration_bounds = array<i64: 1>, scalar_prefetch = 0 : i64, scratch_operands = 0 : i64, tpu.core_type = #tpu.core_type<tc>, window_params = [{transform_indices = @transform_0, window_bounds = array<i64: 8, 128>}, {pipeline_mode = #tpu.pipeline_mode<synchronous>, transform_indices = @transform_1, window_bounds = array<i64: 128, 128>}, {pipeline_mode = #tpu.pipeline_mode<synchronous>, transform_indices = @transform_2, window_bounds = array<i64: 1, 128>}, {pipeline_mode = #tpu.pipeline_mode<synchronous>, transform_indices = @transform_3, window_bounds = array<i64: 128, 128>}, {pipeline_mode = #tpu.pipeline_mode<synchronous>, transform_indices = @transform_4, window_bounds = array<i64: 1, 128>}, {transform_indices = @transform_5, window_bounds = array<i64: 8, 128>}]} {
    %c0 = arith.constant 0 : index
    %c0_0 = arith.constant 0 : index
    %0 = vector.load %arg1[%c0, %c0_0] : memref<8x128xf32, #tpu.memory_space<vmem>>, vector<8x128xf32>
    %c0_1 = arith.constant 0 : index
    %c0_2 = arith.constant 0 : index
    %1 = vector.load %arg2[%c0_1, %c0_2] : memref<128x128xf32, #tpu.memory_space<vmem>>, vector<128x128xf32>
    %cst = arith.constant dense<0.000000e+00> : vector<8x128xf32>
    %2 = tpu.matmul %0, %1, %cst {dimension_numbers = #tpu.dot_dimension_numbers<[1], [0], [0], [1], [0, 0, 1, 1], [], []>} : vector<8x128xf32>, vector<128x128xf32>, vector<8x128xf32> -> vector<8x128xf32>
    %c0_3 = arith.constant 0 : index
    %c0_4 = arith.constant 0 : index
    %3 = vector.load %arg3[%c0_3, %c0_4] : memref<1x128xf32, #tpu.memory_space<vmem>>, vector<1x128xf32>
    %4 = vector.broadcast %3 : vector<1x128xf32> to vector<8x128xf32>
    %5 = arith.addf %2, %4 : vector<8x128xf32>
    %cst_5 = arith.constant 0.00999999977 : f32
    %6 = vector.broadcast %cst_5 : f32 to vector<8x128xf32>
    %7 = arith.mulf %6, %5 : vector<8x128xf32>
    %8 = arith.maximumf %5, %7 : vector<8x128xf32>
    %c0_6 = arith.constant 0 : index
    %c0_7 = arith.constant 0 : index
    %9 = vector.load %arg4[%c0_6, %c0_7] : memref<128x128xf32, #tpu.memory_space<vmem>>, vector<128x128xf32>
    %cst_8 = arith.constant dense<0.000000e+00> : vector<8x128xf32>
    %10 = tpu.matmul %8, %9, %cst_8 {dimension_numbers = #tpu.dot_dimension_numbers<[1], [0], [0], [1], [0, 0, 1, 1], [], []>} : vector<8x128xf32>, vector<128x128xf32>, vector<8x128xf32> -> vector<8x128xf32>
    %c0_9 = arith.constant 0 : index
    %c0_10 = arith.constant 0 : index
    %11 = vector.load %arg5[%c0_9, %c0_10] : memref<1x128xf32, #tpu.memory_space<vmem>>, vector<1x128xf32>
    %12 = vector.broadcast %11 : vector<1x128xf32> to vector<8x128xf32>
    %13 = arith.addf %10, %12 : vector<8x128xf32>
    %14 = arith.addf %13, %0 : vector<8x128xf32>
    %cst_11 = arith.constant 0.00999999977 : f32
    %15 = vector.broadcast %cst_11 : f32 to vector<8x128xf32>
    %16 = arith.mulf %15, %14 : vector<8x128xf32>
    %17 = arith.maximumf %14, %16 : vector<8x128xf32>
    %c0_12 = arith.constant 0 : index
    %c0_13 = arith.constant 0 : index
    %18 = vector.load %arg6[%c0_12, %c0_13] : memref<8x128xf32, #tpu.memory_space<vmem>>, vector<8x128xf32>
    tpu.vector_store %arg6[%c0_12, %c0_13], %17 {strides = array<i32>} : memref<8x128xf32, #tpu.memory_space<vmem>>, vector<8x128xf32>,
    return
  }
  func.func @transform_0(%arg0: i32) -> (i32, i32) {
    %c0_i32 = arith.constant 0 : i32
    %c0_i32_0 = arith.constant 0 : i32
    return %arg0, %c0_i32 : i32, i32
  }
  func.func @transform_1(%arg0: i32) -> (i32, i32) {
    %c0_i32 = arith.constant 0 : i32
    %c0_i32_0 = arith.constant 0 : i32
    %c0_i32_1 = arith.constant 0 : i32
    return %c0_i32, %c0_i32_0 : i32, i32
  }
  func.func @transform_2(%arg0: i32) -> (i32, i32) {
    %c0_i32 = arith.constant 0 : i32
    %c0_i32_0 = arith.constant 0 : i32
    %c0_i32_1 = arith.constant 0 : i32
    return %c0_i32, %c0_i32_0 : i32, i32
  }
  func.func @transform_3(%arg0: i32) -> (i32, i32) {
    %c0_i32 = arith.constant 0 : i32
    %c0_i32_0 = arith.constant 0 : i32
    %c0_i32_1 = arith.constant 0 : i32
    return %c0_i32, %c0_i32_0 : i32, i32
  }
  func.func @transform_4(%arg0: i32) -> (i32, i32) {
    %c0_i32 = arith.constant 0 : i32
    %c0_i32_0 = arith.constant 0 : i32
    %c0_i32_1 = arith.constant 0 : i32
    return %c0_i32, %c0_i32_0 : i32, i32
  }
  func.func @transform_5(%arg0: i32) -> (i32, i32) {
    %c0_i32 = arith.constant 0 : i32
    %c0_i32_0 = arith.constant 0 : i32
    return %arg0, %c0_i32 : i32, i32
  }
}

</mosaic_0001>

<llo_original>
// kernel: tpu_custom_call.1
$region0: #{tpu_custom_call.1}
  #allocation0 [shape = 'u32[]', space=smem, size = 0x4, offset = 0x4, fixed_abs, tag = 'smem constant byte address 0x4 - core index']
  #allocation1 [shape = 'u32[72,128]{1,0:T(1,128)}', space=vmem, size = 0x9000, scoped, tag = 'internal scratch']
  %s0 = inlined_call_operand.hbm [shape: f32[8,128], index: 0, kind: input, shape index: {}]
  %s1 = inlined_call_operand.hbm [shape: f32[128,128], index: 1, kind: input, shape index: {}]
  %s2 = inlined_call_operand.vmem [shape: f32[1,128], index: 2, kind: input, shape index: {}]
  %s3 = inlined_call_operand.hbm [shape: f32[128,128], index: 3, kind: input, shape index: {}]
  %s4 = inlined_call_operand.vmem [shape: f32[1,128], index: 4, kind: input, shape index: {}]
  %s5 = inlined_call_operand.hbm [shape: f32[8,128], index: 5, kind: output, shape index: {}]
  %s6 = sld [smem:[#allocation0]]
  $region42: #{tpu_custom_call.1} parent=0
    _
  %s8 = ssub.s32 1, %s6
  %s9 = scalar_select 0, %s8, %s6
  $region1: #{tpu_custom_call.1} parent=0
    #allocation2 [shape = 'u8[4096]{0}', space=vmem, size = 0x1000, scoped, tag = 'input window, operand 0, single buffered']
    #allocation3 [shape = 's32[1]{0}', space=sflag, size = 0x4, scoped, tag = 'scoped memory for tpu_custom_call.1']
    #allocation4 [shape = 's32[1]{0}', space=sflag, size = 0x4, scoped, tag = 'scoped memory for tpu_custom_call.1']
    #allocation5 [shape = 'u8[65536]{0}', space=vmem, size = 0x10000, scoped, tag = 'input window, operand 1, single buffered']
    #allocation6 [shape = 's32[1]{0}', space=sflag, size = 0x4, scoped, tag = 'scoped memory for tpu_custom_call.1']
    #allocation7 [shape = 'u8[65536]{0}', space=vmem, size = 0x10000, scoped, tag = 'input window, operand 3, single buffered']
    #allocation8 [shape = 'u8[4096]{0}', space=vmem, size = 0x1000, scoped, tag = 'output window, operand 0, single buffered']
    %10 = vsyncpa [#allocation3], 0
    %11 = vsyncpa [#allocation6], 0
    %12 = vsyncpa [#allocation4], 0
    // Predicated region
    $region2: #{tpu_custom_call.1} parent=1 // pred_check
      _
    $region3: #{tpu_custom_call.1} parent=1 // pred_check_branch
      %14 = sbr.rel (0) target = $region5
    $region4: #{tpu_custom_call.1} parent=1 // pred_region
      %16 = vsyncadd [#allocation3], 0
      %s18 = sshll.u32 %s0, 4
      %s19 = int_to_ptr.hbm [resolvable:$true] %s18
      %s20 = sshll.u32 [#allocation2], 4
      %s21 = int_to_ptr.vmem [resolvable:$true] %s20
      %23 = dma.hbm_to_vmem [thread:$0]  %s19, 128, %s21, [#allocation3]
    $region5: #{tpu_custom_call.1} parent=1 // pred_fallthru
      _
    // Predicated region
    $region6: #{tpu_custom_call.1} parent=1 // pred_check
      _
    $region7: #{tpu_custom_call.1} parent=1 // pred_check_branch
      %25 = sbr.rel (0) target = $region9
    $region8: #{tpu_custom_call.1} parent=1 // pred_region
      %27 = vsyncadd [#allocation6], 0
      %s28 = sshll.u32 %s1, 4
      %s29 = int_to_ptr.hbm [resolvable:$true] %s28
      %s30 = sshll.u32 [#allocation5], 4
      %s31 = int_to_ptr.vmem [resolvable:$true] %s30
      %36 = dma.hbm_to_vmem [thread:$0]  %s29, 2048, %s31, [#allocation6], 128, 128, 8
    $region9: #{tpu_custom_call.1} parent=1 // pred_fallthru
      _
    // Predicated region
    $region10: #{tpu_custom_call.1} parent=1 // pred_check
      _
    $region11: #{tpu_custom_call.1} parent=1 // pred_check_branch
      %38 = sbr.rel (0) target = $region13
    $region12: #{tpu_custom_call.1} parent=1 // pred_region
      _
    $region13: #{tpu_custom_call.1} parent=1 // pred_fallthru
      _
    // Predicated region
    $region14: #{tpu_custom_call.1} parent=1 // pred_check
      _
    $region15: #{tpu_custom_call.1} parent=1 // pred_check_branch
      %40 = sbr.rel (0) target = $region17
    $region16: #{tpu_custom_call.1} parent=1 // pred_region
      %42 = vsyncadd [#allocation6], 0
      %s43 = sshll.u32 %s3, 4
      %s44 = int_to_ptr.hbm [resolvable:$true] %s43
      %s45 = sshll.u32 [#allocation7], 4
      %s46 = int_to_ptr.vmem [resolvable:$true] %s45
      %51 = dma.hbm_to_vmem [thread:$0]  %s44, 2048, %s46, [#allocation6], 128, 128, 8
    $region17: #{tpu_custom_call.1} parent=1 // pred_fallthru
      _
    // Predicated region
    $region18: #{tpu_custom_call.1} parent=1 // pred_check
      _
    $region19: #{tpu_custom_call.1} parent=1 // pred_check_branch
      %53 = sbr.rel (0) target = $region21
    $region20: #{tpu_custom_call.1} parent=1 // pred_region
      _
    $region21: #{tpu_custom_call.1} parent=1 // pred_fallthru
      _
    // Predicated region
    $region22: #{tpu_custom_call.1} parent=1 // pred_check
      _
    $region23: #{tpu_custom_call.1} parent=1 // pred_check_branch
      %55 = sbr.rel (0) target = $region25
    $region24: #{tpu_custom_call.1} parent=1 // pred_region
      %57 = dma.done [#allocation3], 128
    $region25: #{tpu_custom_call.1} parent=1 // pred_fallthru
      _
    // Predicated region
    $region26: #{tpu_custom_call.1} parent=1 // pred_check
      _
    $region27: #{tpu_custom_call.1} parent=1 // pred_check_branch
      %59 = sbr.rel (0) target = $region29
    $region28: #{tpu_custom_call.1} parent=1 // pred_region
      %61 = dma.done [#allocation6], 2048
    $region29: #{tpu_custom_call.1} parent=1 // pred_fallthru
      _
    // Predicated region
    $region30: #{tpu_custom_call.1} parent=1 // pred_check
      _
    $region31: #{tpu_custom_call.1} parent=1 // pred_check_branch
      %63 = sbr.rel (0) target = $region33
    $region32: #{tpu_custom_call.1} parent=1 // pred_region
      %65 = dma.done [#allocation6], 2048
    $region33: #{tpu_custom_call.1} parent=1 // pred_fallthru
      _
    %v66 = vld [vmem:[#allocation2] sm:$0xff]
    %v67 = vld [vmem:[#allocation5] sm:$0xff]
    %v68 = vld [vmem:[#allocation5 + $0x8] sm:$0xff]
    %v69 = vld [vmem:[#allocation5 + $0x10] sm:$0xff]
    %v70 = vld [vmem:[#allocation5 + $0x18] sm:$0xff]
    %v71 = vld [vmem:[#allocation5 + $0x20] sm:$0xff]
    %v72 = vld [vmem:[#allocation5 + $0x28] sm:$0xff]
    %v73 = vld [vmem:[#allocation5 + $0x30] sm:$0xff]
    %v74 = vld [vmem:[#allocation5 + $0x38] sm:$0xff]
    %v75 = vld [vmem:[#allocation5 + $0x40] sm:$0xff]
    %v76 = vld [vmem:[#allocation5 + $0x48] sm:$0xff]
    %v77 = vld [vmem:[#allocation5 + $0x50] sm:$0xff]
    %v78 = vld [vmem:[#allocation5 + $0x58] sm:$0xff]
    %v79 = vld [vmem:[#allocation5 + $0x60] sm:$0xff]
    %v80 = vld [vmem:[#allocation5 + $0x68] sm:$0xff]
    %v81 = vld [vmem:[#allocation5 + $0x70] sm:$0xff]
    %v82 = vld [vmem:[#allocation5 + $0x78] sm:$0xff]
    %v83 = vld [vmem:[%s2] sm:$0x1]
    %v85 = vperm.slane %v83, 0
    %87 = vmatpush.msra.mxu0 %v82
    %88 = vmatpush.msra.mxu0 %v81
    %89 = vmatpush.msra.mxu0 %v80
    %90 = vmatpush.msra.mxu0 %v79
    %91 = vmatpush.msra.mxu0 %v78
    %92 = vmatpush.msra.mxu0 %v77
    %93 = vmatpush.msra.mxu0 %v76
    %94 = vmatpush.msra.mxu0 %v75
    %95 = vmatpush.msra.mxu0 %v74
    %96 = vmatpush.msra.mxu0 %v73
    %97 = vmatpush.msra.mxu0 %v72
    %98 = vmatpush.msra.mxu0 %v71
    %99 = vmatpush.msra.mxu0 %v70
    %100 = vmatpush.msra.mxu0 %v69
    %101 = vmatpush.msra.mxu0 %v68
    %102 = vmatpush.msra.mxu0 %v67
    %103 = vmatmul.f32.gmra.mxu0 %v66
    %v104 = vpop.f32.mrf.mxu0
    %v105 = vadd.f32 %v85, %v104
    %106 = vdwg.mxu0
    %v107 = vmul.f32 %v105, 0.01
    %v108 = vmax.f32 %v105, %v107
    %v109 = vld [vmem:[#allocation7] sm:$0xff]
    %v110 = vld [vmem:[#allocation7 + $0x8] sm:$0xff]
    %v111 = vld [vmem:[#allocation7 + $0x10] sm:$0xff]
    %v112 = vld [vmem:[#allocation7 + $0x18] sm:$0xff]
    %v113 = vld [vmem:[#allocation7 + $0x20] sm:$0xff]
    %v114 = vld [vmem:[#allocation7 + $0x28] sm:$0xff]
    %v115 = vld [vmem:[#allocation7 + $0x30] sm:$0xff]
    %v116 = vld [vmem:[#allocation7 + $0x38] sm:$0xff]
    %v117 = vld [vmem:[#allocation7 + $0x40] sm:$0xff]
    %v118 = vld [vmem:[#allocation7 + $0x48] sm:$0xff]
    %v119 = vld [vmem:[#allocation7 + $0x50] sm:$0xff]
    %v120 = vld [vmem:[#allocation7 + $0x58] sm:$0xff]
    %v121 = vld [vmem:[#allocation7 + $0x60] sm:$0xff]
    %v122 = vld [vmem:[#allocation7 + $0x68] sm:$0xff]
    %v123 = vld [vmem:[#allocation7 + $0x70] sm:$0xff]
    %v124 = vld [vmem:[#allocation7 + $0x78] sm:$0xff]
    %v125 = vld [vmem:[%s4] sm:$0x1]
    %v127 = vperm.slane %v125, 0
    %129 = vmatpush.msra.mxu0 %v124
    %130 = vmatpush.msra.mxu0 %v123
    %131 = vmatpush.msra.mxu0 %v122
    %132 = vmatpush.msra.mxu0 %v121
    %133 = vmatpush.msra.mxu0 %v120
    %134 = vmatpush.msra.mxu0 %v119
    %135 = vmatpush.msra.mxu0 %v118
    %136 = vmatpush.msra.mxu0 %v117
    %137 = vmatpush.msra.mxu0 %v116
    %138 = vmatpush.msra.mxu0 %v115
    %139 = vmatpush.msra.mxu0 %v114
    %140 = vmatpush.msra.mxu0 %v113
    %141 = vmatpush.msra.mxu0 %v112
    %142 = vmatpush.msra.mxu0 %v111
    %143 = vmatpush.msra.mxu0 %v110
    %144 = vmatpush.msra.mxu0 %v109
    %145 = vmatmul.f32.gmra.mxu0 %v108
    %v146 = vpop.f32.mrf.mxu0
    %v147 = vadd.f32 %v127, %v146
    %148 = vdwg.mxu0
    %v149 = vadd.f32 %v147, %v66
    %v150 = vmul.f32 %v149, 0.01
    %v151 = vmax.f32 %v149, %v150
    %152 = vst [vmem:[#allocation8] sm:$0xff] %v151
    // Predicated region
    $region34: #{tpu_custom_call.1} parent=1 // pred_check
      _
    $region35: #{tpu_custom_call.1} parent=1 // pred_check_branch
      %154 = sbr.rel (0) target = $region37
    $region36: #{tpu_custom_call.1} parent=1 // pred_region
      %156 = vsyncadd [#allocation4], 0
      %s158 = sshll.u32 [#allocation8], 4
      %s159 = int_to_ptr.vmem [resolvable:$true] %s158
      %s160 = sshll.u32 %s5, 4
      %s161 = int_to_ptr.hbm [resolvable:$true] %s160
      %163 = dma.vmem_to_hbm [thread:$0]  %s159, 128, %s161, [#allocation4]
    $region37: #{tpu_custom_call.1} parent=1 // pred_fallthru
      _
    // Predicated region
    $region38: #{tpu_custom_call.1} parent=1 // pred_check
      _
    $region39: #{tpu_custom_call.1} parent=1 // pred_check_branch
      %165 = sbr.rel (0) target = $region41
    $region40: #{tpu_custom_call.1} parent=1 // pred_region
      %167 = dma.done [#allocation4], 128
    $region41: #{tpu_custom_call.1} parent=1 // pred_fallthru
      _
    %168 = vsyncpa [#allocation3], 1
    %169 = vsyncpa [#allocation6], 1
    %170 = vsyncpa [#allocation4], 1

// kernel: tpu_custom_call.1
$region0: #{tpu_custom_call.1}
  #allocation0 [shape = 'u32[]', space=smem, size = 0x4, offset = 0x4, fixed_abs, tag = 'smem constant byte address 0x4 - core index']
  #allocation1 [shape = 'u32[72,128]{1,0:T(1,128)}', space=vmem, size = 0x9000, scoped, tag = 'internal scratch']
  %s0 = inlined_call_operand.hbm [shape: f32[8,128], index: 0, kind: input, shape index: {}]
  %s1 = inlined_call_operand.hbm [shape: f32[128,128], index: 1, kind: input, shape index: {}]
  %s2 = inlined_call_operand.vmem [shape: f32[1,128], index: 2, kind: input, shape index: {}]
  %s3 = inlined_call_operand.hbm [shape: f32[128,128], index: 3, kind: input, shape index: {}]
  %s4 = inlined_call_operand.vmem [shape: f32[1,128], index: 4, kind: input, shape index: {}]
  %s5 = inlined_call_operand.hbm [shape: f32[8,128], index: 5, kind: output, shape index: {}]
  %s6 = sld [smem:[#allocation0]]
  $region42: #{tpu_custom_call.1} parent=0
    _
  %s8 = ssub.s32 1, %s6
  %s9 = scalar_select 0, %s8, %s6
  $region1: #{tpu_custom_call.1} parent=0
    #allocation2 [shape = 'u8[4096]{0}', space=vmem, size = 0x1000, scoped, tag = 'input window, operand 0, single buffered']
    #allocation3 [shape = 's32[1]{0}', space=sflag, size = 0x4, scoped, tag = 'scoped memory for tpu_custom_call.1']
    #allocation4 [shape = 's32[1]{0}', space=sflag, size = 0x4, scoped, tag = 'scoped memory for tpu_custom_call.1']
    #allocation5 [shape = 'u8[65536]{0}', space=vmem, size = 0x10000, scoped, tag = 'input window, operand 1, single buffered']
    #allocation6 [shape = 's32[1]{0}', space=sflag, size = 0x4, scoped, tag = 'scoped memory for tpu_custom_call.1']
    #allocation7 [shape = 'u8[65536]{0}', space=vmem, size = 0x10000, scoped, tag = 'input window, operand 3, single buffered']
    #allocation8 [shape = 'u8[4096]{0}', space=vmem, size = 0x1000, scoped, tag = 'output window, operand 0, single buffered']
    %10 = vsyncpa [#allocation3], 0
    %11 = vsyncpa [#allocation6], 0
    %12 = vsyncpa [#allocation4], 0
    // Predicated region
    $region2: #{tpu_custom_call.1} parent=1 // pred_check
      _
    $region3: #{tpu_custom_call.1} parent=1 // pred_check_branch
      %14 = sbr.rel (0) target = $region5
    $region4: #{tpu_custom_call.1} parent=1 // pred_region
      %16 = vsyncadd [#allocation3], 0
      %s18 = sshll.u32 %s0, 4
      %s19 = int_to_ptr.hbm [resolvable:$true] %s18
      %s20 = sshll.u32 [#allocation2], 4
      %s21 = int_to_ptr.vmem [resolvable:$true] %s20
      %23 = dma.hbm_to_vmem [thread:$0]  %s19, 128, %s21, [#allocation3]
    $region5: #{tpu_custom_call.1} parent=1 // pred_fallthru
      _
    // Predicated region
    $region6: #{tpu_custom_call.1} parent=1 // pred_check
      _
    $region7: #{tpu_custom_call.1} parent=1 // pred_check_branch
      %25 = sbr.rel (0) target = $region9
    $region8: #{tpu_custom_call.1} parent=1 // pred_region
      %27 = vsyncadd [#allocation6], 0
      %s28 = sshll.u32 %s1, 4
      %s29 = int_to_ptr.hbm [resolvable:$true] %s28
      %s30 = sshll.u32 [#allocation5], 4
      %s31 = int_to_ptr.vmem [resolvable:$true] %s30
      %36 = dma.hbm_to_vmem [thread:$0]  %s29, 2048, %s31, [#allocation6], 128, 128, 8
    $region9: #{tpu_custom_call.1} parent=1 // pred_fallthru
      _
    // Predicated region
    $region10: #{tpu_custom_call.1} parent=1 // pred_check
      _
    $region11: #{tpu_custom_call.1} parent=1 // pred_check_branch
      %38 = sbr.rel (0) target = $region13
    $region12: #{tpu_custom_call.1} parent=1 // pred_region
      _
    $region13: #{tpu_custom_call.1} parent=1 // pred_fallthru
      _
    // Predicated region
    $region14: #{tpu_custom_call.1} parent=1 // pred_check
      _
    $region15: #{tpu_custom_call.1} parent=1 // pred_check_branch
      %40 = sbr.rel (0) target = $region17
    $region16: #{tpu_custom_call.1} parent=1 // pred_region
      %42 = vsyncadd [#allocation6], 0
      %s43 = sshll.u32 %s3, 4
      %s44 = int_to_ptr.hbm [resolvable:$true] %s43
      %s45 = sshll.u32 [#allocation7], 4
      %s46 = int_to_ptr.vmem [resolvable:$true] %s45
      %51 = dma.hbm_to_vmem [thread:$0]  %s44, 2048, %s46, [#allocation6], 128, 128, 8
    $region17: #{tpu_custom_call.1} parent=1 // pred_fallthru
      _
    // Predicated region
    $region18: #{tpu_custom_call.1} parent=1 // pred_check
      _
    $region19: #{tpu_custom_call.1} parent=1 // pred_check_branch
      %53 = sbr.rel (0) target = $region21
    $region20: #{tpu_custom_call.1} parent=1 // pred_region
      _
    $region21: #{tpu_custom_call.1} parent=1 // pred_fallthru
      _
    // Predicated region
    $region22: #{tpu_custom_call.1} parent=1 // pred_check
      _
    $region23: #{tpu_custom_call.1} parent=1 // pred_check_branch
      %55 = sbr.rel (0) target = $region25
    $region24: #{tpu_custom_call.1} parent=1 // pred_region
      %57 = dma.done [#allocation3], 128
    $region25: #{tpu_custom_call.1} parent=1 // pred_fallthru
      _
    // Predicated region
    $region26: #{tpu_custom_call.1} parent=1 // pred_check
      _
    $region27: #{tpu_custom_call.1} parent=1 // pred_check_branch
      %59 = sbr.rel (0) target = $region29
    $region28: #{tpu_custom_call.1} parent=1 // pred_region
      %61 = dma.done [#allocation6], 2048
    $region29: #{tpu_custom_call.1} parent=1 // pred_fallthru
      _
    // Predicated region
    $region30: #{tpu_custom_call.1} parent=1 // pred_check
      _
    $region31: #{tpu_custom_call.1} parent=1 // pred_check_branch
      %63 = sbr.rel (0) target = $region33
    $region32: #{tpu_custom_call.1} parent=1 // pred_region
      %65 = dma.done [#allocation6], 2048
    $region33: #{tpu_custom_call.1} parent=1 // pred_fallthru
      _
    %v66 = vld [vmem:[#allocation2] sm:$0xff]
    %v67 = vld [vmem:[#allocation5] sm:$0xff]
    %v68 = vld [vmem:[#allocation5 + $0x8] sm:$0xff]
    %v69 = vld [vmem:[#allocation5 + $0x10] sm:$0xff]
    %v70 = vld [vmem:[#allocation5 + $0x18] sm:$0xff]
    %v71 = vld [vmem:[#allocation5 + $0x20] sm:$0xff]
    %v72 = vld [vmem:[#allocation5 + $0x28] sm:$0xff]
    %v73 = vld [vmem:[#allocation5 + $0x30] sm:$0xff]
    %v74 = vld [vmem:[#allocation5 + $0x38] sm:$0xff]
    %v75 = vld [vmem:[#allocation5 + $0x40] sm:$0xff]
    %v76 = vld [vmem:[#allocation5 + $0x48] sm:$0xff]
    %v77 = vld [vmem:[#allocation5 + $0x50] sm:$0xff]
    %v78 = vld [vmem:[#allocation5 + $0x58] sm:$0xff]
    %v79 = vld [vmem:[#allocation5 + $0x60] sm:$0xff]
    %v80 = vld [vmem:[#allocation5 + $0x68] sm:$0xff]
    %v81 = vld [vmem:[#allocation5 + $0x70] sm:$0xff]
    %v82 = vld [vmem:[#allocation5 + $0x78] sm:$0xff]
    %v83 = vld [vmem:[%s2] sm:$0x1]
    %v85 = vperm.slane %v83, 0
    %87 = vmatpush.msra.mxu0 %v82
    %88 = vmatpush.msra.mxu0 %v81
    %89 = vmatpush.msra.mxu0 %v80
    %90 = vmatpush.msra.mxu0 %v79
    %91 = vmatpush.msra.mxu0 %v78
    %92 = vmatpush.msra.mxu0 %v77
    %93 = vmatpush.msra.mxu0 %v76
    %94 = vmatpush.msra.mxu0 %v75
    %95 = vmatpush.msra.mxu0 %v74
    %96 = vmatpush.msra.mxu0 %v73
    %97 = vmatpush.msra.mxu0 %v72
    %98 = vmatpush.msra.mxu0 %v71
    %99 = vmatpush.msra.mxu0 %v70
    %100 = vmatpush.msra.mxu0 %v69
    %101 = vmatpush.msra.mxu0 %v68
    %102 = vmatpush.msra.mxu0 %v67
    %103 = vmatmul.f32.gmra.mxu0 %v66
    %v104 = vpop.f32.mrf.mxu0
    %v105 = vadd.f32 %v85, %v104
    %106 = vdwg.mxu0
    %v107 = vmul.f32 %v105, 0.01
    %v108 = vmax.f32 %v105, %v107
    %v109 = vld [vmem:[#allocation7] sm:$0xff]
    %v110 = vld [vmem:[#allocation7 + $0x8] sm:$0xff]
    %v111 = vld [vmem:[#allocation7 + $0x10] sm:$0xff]
    %v112 = vld [vmem:[#allocation7 + $0x18] sm:$0xff]
    %v113 = vld [vmem:[#allocation7 + $0x20] sm:$0xff]
    %v114 = vld [vmem:[#allocation7 + $0x28] sm:$0xff]
    %v115 = vld [vmem:[#allocation7 + $0x30] sm:$0xff]
    %v116 = vld [vmem:[#allocation7 + $0x38] sm:$0xff]
    %v117 = vld [vmem:[#allocation7 + $0x40] sm:$0xff]
    %v118 = vld [vmem:[#allocation7 + $0x48] sm:$0xff]
    %v119 = vld [vmem:[#allocation7 + $0x50] sm:$0xff]
    %v120 = vld [vmem:[#allocation7 + $0x58] sm:$0xff]
    %v121 = vld [vmem:[#allocation7 + $0x60] sm:$0xff]
    %v122 = vld [vmem:[#allocation7 + $0x68] sm:$0xff]
    %v123 = vld [vmem:[#allocation7 + $0x70] sm:$0xff]
    %v124 = vld [vmem:[#allocation7 + $0x78] sm:$0xff]
    %v125 = vld [vmem:[%s4] sm:$0x1]
    %v127 = vperm.slane %v125, 0
    %129 = vmatpush.msra.mxu0 %v124
    %130 = vmatpush.msra.mxu0 %v123
    %131 = vmatpush.msra.mxu0 %v122
    %132 = vmatpush.msra.mxu0 %v121
    %133 = vmatpush.msra.mxu0 %v120
    %134 = vmatpush.msra.mxu0 %v119
    %135 = vmatpush.msra.mxu0 %v118
    %136 = vmatpush.msra.mxu0 %v117
    %137 = vmatpush.msra.mxu0 %v116
    %138 = vmatpush.msra.mxu0 %v115
    %139 = vmatpush.msra.mxu0 %v114
    %140 = vmatpush.msra.mxu0 %v113
    %141 = vmatpush.msra.mxu0 %v112
    %142 = vmatpush.msra.mxu0 %v111
    %143 = vmatpush.msra.mxu0 %v110
    %144 = vmatpush.msra.mxu0 %v109
    %145 = vmatmul.f32.gmra.mxu0 %v108
    %v146 = vpop.f32.mrf.mxu0
    %v147 = vadd.f32 %v127, %v146
    %148 = vdwg.mxu0
    %v149 = vadd.f32 %v147, %v66
    %v150 = vmul.f32 %v149, 0.01
    %v151 = vmax.f32 %v149, %v150
    %152 = vst [vmem:[#allocation8] sm:$0xff] %v151
    // Predicated region
    $region34: #{tpu_custom_call.1} parent=1 // pred_check
      _
    $region35: #{tpu_custom_call.1} parent=1 // pred_check_branch
      %154 = sbr.rel (0) target = $region37
    $region36: #{tpu_custom_call.1} parent=1 // pred_region
      %156 = vsyncadd [#allocation4], 0
      %s158 = sshll.u32 [#allocation8], 4
      %s159 = int_to_ptr.vmem [resolvable:$true] %s158
      %s160 = sshll.u32 %s5, 4
      %s161 = int_to_ptr.hbm [resolvable:$true] %s160
      %163 = dma.vmem_to_hbm [thread:$0]  %s159, 128, %s161, [#allocation4]
    $region37: #{tpu_custom_call.1} parent=1 // pred_fallthru
      _
    // Predicated region
    $region38: #{tpu_custom_call.1} parent=1 // pred_check
      _
    $region39: #{tpu_custom_call.1} parent=1 // pred_check_branch
      %165 = sbr.rel (0) target = $region41
    $region40: #{tpu_custom_call.1} parent=1 // pred_region
      %167 = dma.done [#allocation4], 128
    $region41: #{tpu_custom_call.1} parent=1 // pred_fallthru
      _
    %168 = vsyncpa [#allocation3], 1
    %169 = vsyncpa [#allocation6], 1
    %170 = vsyncpa [#allocation4], 1

</llo_original>
